<compile_context>
chip_gen: v7x
topology: tpu7x:2x2x1
jax: 0.10.0
libtpu: 0.0.40
codegen_flags: <defaults>
</compile_context>

<pallas_src>
import functools

import jax
import jax.numpy as jnp
from jax import lax
from jax.experimental import pallas as pl
from jax.experimental.pallas import tpu as pltpu


def _sumsq_kernel(x_ref, out_ref, acc_ref, *, total_rows, block_rows, fold,
                  acc_rows):
    """Accumulates sum(X**2) over this split's row shard; writes one partial."""
    c = pl.program_id(0)          # split / core index
    i = pl.program_id(1)          # block index within the split
    inner = pl.num_programs(1)

    @pl.when(i == 0)
    def _init():
        acc_ref[...] = jnp.zeros_like(acc_ref)

    # Logical (unclamped) first global row of this tile.
    row0 = (c * inner + i) * block_rows

    # Fast path: whole tile provably in range -> no iota, no select.
    @pl.when(row0 + block_rows <= total_rows)
    def _fast():
        x = x_ref[...].astype(jnp.float32)                       # (block_rows, C)
        acc_ref[...] += jnp.sum((x * x).reshape(fold, acc_rows, -1), axis=0)

    # Masked path: only the ragged last tile and fully-clamped tiles land here.
    @pl.when(row0 + block_rows > total_rows)
    def _masked():
        x = x_ref[...].astype(jnp.float32)
        rows = row0 + lax.broadcasted_iota(jnp.int32, (block_rows, 1), 0)
        # Select AFTER the square so garbage in Pallas-padded rows is discarded.
        xsq = jnp.where(rows < total_rows, x * x, 0.0)
        acc_ref[...] += jnp.sum(xsq.reshape(fold, acc_rows, -1), axis=0)

    @pl.when(i == inner - 1)
    def _epilogue():
        # Single cross-lane/sublane reduce of the vreg-shaped accumulator.
        out_ref[...] = jnp.sum(acc_ref[...], keepdims=True).reshape(1, 1, 1)


def _pick_lane_dense_view(Z):
    """Free (metadata-only) lane-dense 2-D view of Z when possible."""
    B, D = Z.shape
    N = B * D
    for L in (1024, 512, 256, 128):
        if N % L == 0:
            return Z.reshape(N // L, L), N // L, L
    return Z, B, D


def _num_tensorcores_per_chip():
    """2 on v7x (2 TCs/chip), else 1 (v5e / v6e). Safe default is 1."""
    try:
        kind = jax.devices()[0].device_kind.lower()
    except Exception:
        return 1
    return 2 if ("v7" in kind or "7x" in kind) else 1


def _choose_block_rows(total_rows, lane_width, itemsize, target_tile_bytes):
    # Sub-32-bit inputs get half the budget: the in-kernel f32 cast + square
    # temporaries are 2-4x the input tile, and must fit the scoped VMEM limit.
    budget = target_tile_bytes if itemsize >= 4 else max(
        target_tile_bytes // 2, 64 * 1024)
    c_pad = ((lane_width + 127) // 128) * 128      # lanes pad to 128 in VMEM
    rows = budget // max(1, c_pad * itemsize)
    rows = max(8, (rows // 8) * 8)
    if rows >= total_rows:
        return int(total_rows)                     # single full-extent block
    return int(rows)


@functools.partial(
    jax.jit, static_argnames=("num_dim", "min_kernel_bytes", "target_tile_bytes"))
def inn_loss(Z, log_jac_det, *, num_dim, min_kernel_bytes=1 << 20,
             target_tile_bytes=4 * 1024 * 1024):
    B = Z.shape[0]
    N = int(Z.size)
    scale = 1.0 / float(B * num_dim)

    sum_ljd = jnp.sum(log_jac_det.astype(jnp.float32))

    # Tiny-input bypass: launch + ~0.35 us/step grid overhead dominates; the
    # fused XLA path is simply faster there.
    if N * Z.dtype.itemsize < min_kernel_bytes:
        zf = Z.astype(jnp.float32)
        return (0.5 * jnp.sum(zf * zf) - sum_ljd) * jnp.float32(scale)

    X, total_rows, C = _pick_lane_dense_view(Z)
    block_rows = _choose_block_rows(total_rows, C, Z.dtype.itemsize,
                                    target_tile_bytes)
    num_blocks = pl.cdiv(total_rows, block_rows)

    num_splits = _num_tensorcores_per_chip()
    if num_blocks < 2:
        num_splits = 1
    inner = pl.cdiv(num_blocks, num_splits)

    # Accumulator is one vreg-row group (8, C) when possible; otherwise the
    # (small) full block.
    if block_rows % 8 == 0:
        acc_rows, fold = 8, block_rows // 8
    else:
        acc_rows, fold = block_rows, 1

    def x_index_map(c, i):
        # Clamp: a fully out-of-range block (odd block count on the 2nd split)
        # re-reads the last valid block; the kernel masks its rows to zero.
        return (jnp.minimum(c * inner + i, num_blocks - 1), 0)

    kernel = functools.partial(
        _sumsq_kernel, total_rows=total_rows, block_rows=block_rows,
        fold=fold, acc_rows=acc_rows)

    partials = pl.pallas_call(
        kernel,
        out_shape=jax.ShapeDtypeStruct((num_splits, 1, 1), jnp.float32),
        grid_spec=pltpu.PrefetchScalarGridSpec(
            num_scalar_prefetch=0,
            grid=(num_splits, inner),
            in_specs=[pl.BlockSpec((block_rows, C), x_index_map)],
            out_specs=pl.BlockSpec((1, 1, 1), lambda c, i: (c, 0, 0)),
            scratch_shapes=[pltpu.VMEM((acc_rows, C), jnp.float32)],
        ),
        compiler_params=pltpu.CompilerParams(
            dimension_semantics=("parallel", "arbitrary"),
            vmem_limit_bytes=32 * 1024 * 1024,
        ),
        cost_estimate=pl.CostEstimate(
            flops=2 * N, transcendentals=0,
            bytes_accessed=N * Z.dtype.itemsize),
    )(X)

    # Final combine: tiny scalar ops; log_jac_det sum hoisted out of the kernel.
    sum_sq = jnp.sum(partials)
    return (0.5 * sum_sq - sum_ljd) * jnp.float32(scale)


def inn_loss_ref(Z, log_jac_det, num_dim):
    losses = (0.5 * jnp.sum(Z.astype(jnp.float32) ** 2, axis=1)
              - log_jac_det.astype(jnp.float32))
    return jnp.mean(losses) / num_dim


if __name__ == "__main__":
    key = jax.random.PRNGKey(0)
    k = jax.random.split(key, 8)

    def check(Z, ljd, num_dim, **kw):
        out = jax.block_until_ready(inn_loss(Z, ljd, num_dim=num_dim, **kw))
        ref = inn_loss_ref(Z, ljd, num_dim)
        assert jnp.allclose(out, ref, rtol=1e-5, atol=1e-5), (out, ref)

    # 1) Module-scale small shape, forced through the Pallas kernel
    #    (lane-dense view: N=512 -> (1, 512)).
    B, num_dim = 16, 32
    Z1 = jax.random.normal(k[0], (B, num_dim), jnp.float32)
    l1 = jax.random.normal(k[1], (B,), jnp.float32)
    check(Z1, l1, num_dim, min_kernel_bytes=0)

    # 2) Same tiny input through the default auto path (pure-jnp bypass).
    check(Z1, l1, num_dim)

    # 3) Multi-block lane-dense view with a ragged (masked) last tile:
    #    N=76800 -> (75, 1024); a small tile target forces several grid steps
    #    and exercises the fast path, the masked path and the clamped block.
    Z2 = jax.random.normal(k[2], (300, 256), jnp.float32)
    l2 = jax.random.normal(k[3], (300,), jnp.float32)
    check(Z2, l2, 256, min_kernel_bytes=0, target_tile_bytes=64 * 1024)

    # 4) Odd feature dim -> fallback (B, D) layout (D not lane-aligned).
    Z3 = jax.random.normal(k[4], (48, 33), jnp.float32)
    l3 = jax.random.normal(k[5], (48,), jnp.float32)
    check(Z3, l3, 33, min_kernel_bytes=0)

    # 5) bf16 input (f32 accumulation in-kernel).
    Z4 = jax.random.normal(k[6], (128, 64), jnp.float32).astype(jnp.bfloat16)
    l4 = jax.random.normal(k[7], (128,), jnp.float32)
    check(Z4, l4, 64, min_kernel_bytes=0)

    print("KERNEL_OK")
</pallas_src>

<mosaic_0001>
module attributes {stable_mosaic.version = 11 : i64} {
  func.func @_sumsq_kernel(%arg0: i32, %arg1: i32, %arg2: memref<1x512xf32, #tpu.memory_space<vmem>>, %arg3: memref<1x1x1xf32, #tpu.memory_space<vmem>>, %arg4: memref<1x512xf32, #tpu.memory_space<vmem>>) attributes {dimension_semantics = [#tpu.dimension_semantics<parallel>, #tpu.dimension_semantics<arbitrary>], iteration_bounds = array<i64: 1, 1>, scalar_prefetch = 0 : i64, scratch_operands = 1 : i64, tpu.core_type = #tpu.core_type<tc>, window_params = [{transform_indices = @transform_0, window_bounds = array<i64: 1, 512>}, {transform_indices = @transform_1, window_bounds = array<i64: 1, 1, 1>}]} {
    %c0_i32 = arith.constant 0 : i32
    %0 = arith.cmpi eq, %arg1, %c0_i32 : i32
    %1 = arith.extui %0 : i1 to i32
    %c0_i32_0 = arith.constant 0 : i32
    %2 = arith.cmpi ne, %1, %c0_i32_0 : i32
    scf.if %2 {
      %cst = arith.constant 0.000000e+00 : f32
      %17 = vector.broadcast %cst : f32 to vector<1x512xf32>
      %c0 = arith.constant 0 : index
      %c0_10 = arith.constant 0 : index
      %18 = vector.load %arg4[%c0, %c0_10] : memref<1x512xf32, #tpu.memory_space<vmem>>, vector<1x512xf32>
      tpu.vector_store %arg4[%c0, %c0_10], %17 {strides = array<i32>} : memref<1x512xf32, #tpu.memory_space<vmem>>, vector<1x512xf32>,
    } else {
    }
    %c1_i32 = arith.constant 1 : i32
    %3 = arith.muli %arg0, %c1_i32 : i32
    %4 = arith.addi %3, %arg1 : i32
    %c1_i32_1 = arith.constant 1 : i32
    %5 = arith.muli %4, %c1_i32_1 : i32
    %c1_i32_2 = arith.constant 1 : i32
    %6 = arith.addi %5, %c1_i32_2 : i32
    %c1_i32_3 = arith.constant 1 : i32
    %7 = arith.cmpi sle, %6, %c1_i32_3 : i32
    %8 = arith.extui %7 : i1 to i32
    %c0_i32_4 = arith.constant 0 : i32
    %9 = arith.cmpi ne, %8, %c0_i32_4 : i32
    scf.if %9 {
      %c0 = arith.constant 0 : index
      %c0_10 = arith.constant 0 : index
      %17 = vector.load %arg2[%c0, %c0_10] : memref<1x512xf32, #tpu.memory_space<vmem>>, vector<1x512xf32>
      %c0_11 = arith.constant 0 : index
      %c0_12 = arith.constant 0 : index
      %18 = vector.load %arg4[%c0_11, %c0_12] : memref<1x512xf32, #tpu.memory_space<vmem>>, vector<1x512xf32>
      %19 = arith.mulf %17, %17 : vector<1x512xf32>
      %20 = vector.shape_cast %19 : vector<1x512xf32> to vector<1x1x512xf32>
      %cst = arith.constant dense<0.000000e+00> : vector<1x512xf32>
      %21 = vector.multi_reduction <add>, %20, %cst [0] : vector<1x1x512xf32> to vector<1x512xf32>
      %22 = arith.addf %18, %21 : vector<1x512xf32>
      %c0_13 = arith.constant 0 : index
      %c0_14 = arith.constant 0 : index
      %23 = vector.load %arg4[%c0_13, %c0_14] : memref<1x512xf32, #tpu.memory_space<vmem>>, vector<1x512xf32>
      tpu.vector_store %arg4[%c0_13, %c0_14], %22 {strides = array<i32>} : memref<1x512xf32, #tpu.memory_space<vmem>>, vector<1x512xf32>,
    } else {
    }
    %c1_i32_5 = arith.constant 1 : i32
    %10 = arith.addi %5, %c1_i32_5 : i32
    %c1_i32_6 = arith.constant 1 : i32
    %11 = arith.cmpi sgt, %10, %c1_i32_6 : i32
    %12 = arith.extui %11 : i1 to i32
    %c0_i32_7 = arith.constant 0 : i32
    %13 = arith.cmpi ne, %12, %c0_i32_7 : i32
    scf.if %13 {
      %c0 = arith.constant 0 : index
      %c0_10 = arith.constant 0 : index
      %17 = vector.load %arg2[%c0, %c0_10] : memref<1x512xf32, #tpu.memory_space<vmem>>, vector<1x512xf32>
      %18 = tpu.iota {dimensions = array<i32: 0>} : vector<1x1xi32>
      %19 = vector.broadcast %5 : i32 to vector<1x1xi32>
      %20 = arith.addi %19, %18 : vector<1x1xi32>
      %c1_i32_11 = arith.constant 1 : i32
      %21 = vector.broadcast %c1_i32_11 : i32 to vector<1x1xi32>
      %22 = arith.cmpi slt, %20, %21 : vector<1x1xi32>
      %23 = arith.mulf %17, %17 : vector<1x512xf32>
      %cst = arith.constant 0.000000e+00 : f32
      %24 = vector.shape_cast %22 : vector<1x1xi1> to vector<1x1xi1>
      %25 = vector.broadcast %24 : vector<1x1xi1> to vector<1x512xi1>
      %26 = vector.broadcast %cst : f32 to vector<1x512xf32>
      %27 = arith.select %25, %23, %26 : vector<1x512xi1>, vector<1x512xf32>
      %c0_12 = arith.constant 0 : index
      %c0_13 = arith.constant 0 : index
      %28 = vector.load %arg4[%c0_12, %c0_13] : memref<1x512xf32, #tpu.memory_space<vmem>>, vector<1x512xf32>
      %29 = vector.shape_cast %27 : vector<1x512xf32> to vector<1x1x512xf32>
      %cst_14 = arith.constant dense<0.000000e+00> : vector<1x512xf32>
      %30 = vector.multi_reduction <add>, %29, %cst_14 [0] : vector<1x1x512xf32> to vector<1x512xf32>
      %31 = arith.addf %28, %30 : vector<1x512xf32>
      %c0_15 = arith.constant 0 : index
      %c0_16 = arith.constant 0 : index
      %32 = vector.load %arg4[%c0_15, %c0_16] : memref<1x512xf32, #tpu.memory_space<vmem>>, vector<1x512xf32>
      tpu.vector_store %arg4[%c0_15, %c0_16], %31 {strides = array<i32>} : memref<1x512xf32, #tpu.memory_space<vmem>>, vector<1x512xf32>,
    } else {
    }
    %c0_i32_8 = arith.constant 0 : i32
    %14 = arith.cmpi eq, %arg1, %c0_i32_8 : i32
    %15 = arith.extui %14 : i1 to i32
    %c0_i32_9 = arith.constant 0 : i32
    %16 = arith.cmpi ne, %15, %c0_i32_9 : i32
    scf.if %16 {
      %c0 = arith.constant 0 : index
      %c0_10 = arith.constant 0 : index
      %17 = vector.load %arg4[%c0, %c0_10] : memref<1x512xf32, #tpu.memory_space<vmem>>, vector<1x512xf32>
      %18 = vector.shape_cast %17 : vector<1x512xf32> to vector<1x1x512xf32>
      %cst = arith.constant dense<0.000000e+00> : vector<1xf32>
      %19 = vector.multi_reduction <add>, %18, %cst [1, 2] : vector<1x1x512xf32> to vector<1xf32>
      %20 = vector.shape_cast %19 : vector<1xf32> to vector<1x1x1xf32>
      %21 = vector.extract %20[0, 0, 0] : f32 from vector<1x1x1xf32>
      %22 = vector.broadcast %21 : f32 to vector<1x1xf32>
      %23 = vector.shape_cast %22 : vector<1x1xf32> to vector<1x1x1xf32>
      %c0_11 = arith.constant 0 : index
      %c0_12 = arith.constant 0 : index
      %c0_13 = arith.constant 0 : index
      %24 = vector.load %arg3[%c0_11, %c0_12, %c0_13] : memref<1x1x1xf32, #tpu.memory_space<vmem>>, vector<1x1x1xf32>
      tpu.vector_store %arg3[%c0_11, %c0_12, %c0_13], %23 {strides = array<i32>} : memref<1x1x1xf32, #tpu.memory_space<vmem>>, vector<1x1x1xf32>,
    } else {
    }
    return
  }
  func.func @transform_0(%arg0: i32, %arg1: i32) -> (i32, i32) {
    %c1_i32 = arith.constant 1 : i32
    %0 = arith.muli %arg0, %c1_i32 : i32
    %1 = arith.addi %0, %arg1 : i32
    %c0_i32 = arith.constant 0 : i32
    %2 = arith.minsi %1, %c0_i32 : i32
    %c0_i32_0 = arith.constant 0 : i32
    %c0_i32_1 = arith.constant 0 : i32
    return %2, %c0_i32_0 : i32, i32
  }
  func.func @transform_1(%arg0: i32, %arg1: i32) -> (i32, i32, i32) {
    %c0_i32 = arith.constant 0 : i32
    %c0_i32_0 = arith.constant 0 : i32
    %c0_i32_1 = arith.constant 0 : i32
    return %arg0, %c0_i32, %c0_i32_0 : i32, i32, i32
  }
}

</mosaic_0001>

<llo_original>
// kernel: inn_loss.1
$region0: #{inn_loss.1}
  #allocation0 [shape = 'u32[]', space=smem, size = 0x4, offset = 0x4, fixed_abs, tag = 'smem constant byte address 0x4 - core index']
  #allocation1 [shape = 'u32[144,128]{1,0:T(1,128)}', space=vmem, size = 0x12000, scoped, tag = 'internal scratch']
  #allocation2 [shape = 'f32[1,512]{1,0:T(1,128)}', space=vmem, size = 0x800, scoped, tag = 'scratch operand']
  %s0 = inlined_call_operand.vmem [shape: f32[1,512], index: 0, kind: input, shape index: {}]
  %s1 = inlined_call_operand.hbm [shape: f32[1,1,1], index: 1, kind: output, shape index: {}]
  %s2 = sld [smem:[#allocation0]]
  $region30: #{inn_loss.1} parent=0
    _
  %s4 = ssub.s32 1, %s2
  %s5 = scalar_select 0, %s4, %s2
  $region1: #{inn_loss.1} parent=0
    #allocation3 [shape = 'u8[512]{0}', space=vmem, size = 0x400, scoped, tag = 'output window, operand 0, single buffered']
    #allocation4 [shape = 's32[1]{0}', space=sflag, size = 0x4, scoped, tag = 'scoped memory for inn_loss.1']
    %6 = vsyncpa [#allocation4], 0
    // Predicated region
    $region2: #{inn_loss.1} parent=1 // pred_check
      _
    $region3: #{inn_loss.1} parent=1 // pred_check_branch
      %8 = sbr.rel (0) target = $region5
    $region4: #{inn_loss.1} parent=1 // pred_region
      %s9 = sadd.s32 0, 0
      %p10 = scmp.lt.s32.totalorder %s9, 0
      %s11 = scalar_select %p10, %s9, 0
      %p12 = scmp.lt.s32.totalorder %s11, 0
      %s13 = scalar_select %p12, %s11, 0
      %s14 = smul.addr %s13, 4
      %s15 = scalar_lea.vmem %s0, %s14
      %s16 = sadd.s32 0, 0
      %p17 = scmp.lt.s32.totalorder %s16, 0
      %s18 = scalar_select %p17, %s16, 0
    $region5: #{inn_loss.1} parent=1 // pred_fallthru
      _
    %s19 = sadd.s32 0, 0
    %p20 = scmp.lt.s32.totalorder %s19, 0
    %s21 = scalar_select %p20, %s19, 0
    %p22 = scmp.lt.s32.totalorder %s21, 0
    %s23 = scalar_select %p22, %s21, 0
    %s24 = smul.addr %s23, 4
    %s25 = scalar_lea.vmem %s0, %s24
    %s26 = sadd.s32 0, 0
    %p27 = scmp.lt.s32.totalorder %s26, 0
    %s28 = scalar_select %p27, %s26, 0
    %p29 = scmp.lt.s32.totalorder %s28, 0
    %s30 = scalar_select %p29, %s28, 0
    %s31 = smul.addr %s30, 4
    %s32 = scalar_lea.vmem %s0, %s31
    %s33 = sadd.s32 0, 0
    %p34 = scmp.lt.s32.totalorder %s33, 0
    %s35 = scalar_select %p34, %s33, 0
    %p36 = scmp.eq.s32.totalorder 0, 0
    // Predicated region
    $region6: #{inn_loss.1} parent=1 // pred_check
      %p37 = pneg %p36
    $region7: #{inn_loss.1} parent=1 // pred_check_branch
      %39 = sbr.rel (%p37) target = $region9
    $region8: #{inn_loss.1} parent=1 // pred_region
      %v40 = vlaneseq
      %vm41 = vcmp.ge.s32.totalorder %v40, 0
      %vm42 = vcmp.lt.s32.totalorder %v40, 512
      %vm43 = vmand %vm41, %vm42
      %44 = vst.msk [vmem:[#allocation2] sm:$0xf] %vm43, 0.0
    $region9: #{inn_loss.1} parent=1 // pred_fallthru
      _
    %s45 = sadd.s32 0, 0
    %s46 = sadd.s32 %s45, 1
    %p47 = scmp.le.s32.totalorder %s46, 1
    // Predicated region
    $region10: #{inn_loss.1} parent=1 // pred_check
      %p48 = pneg %p47
    $region11: #{inn_loss.1} parent=1 // pred_check_branch
      %50 = sbr.rel (%p48) target = $region13
    $region12: #{inn_loss.1} parent=1 // pred_region
      %v51 = vld [vmem:[%s32] sm:$0xf]
      %v52 = vld [vmem:[#allocation2] sm:$0xf]
      %v53 = vmul.f32 %v51, %v51
      %v54 = vadd.f32 %v53, 0.0
      %v55 = vadd.f32 %v52, %v54
      %v56 = vlaneseq
      %vm57 = vcmp.ge.s32.totalorder %v56, 0
      %vm58 = vcmp.lt.s32.totalorder %v56, 512
      %vm59 = vmand %vm57, %vm58
      %60 = vst.msk [vmem:[#allocation2] sm:$0xf] %vm59, %v55
    $region13: #{inn_loss.1} parent=1 // pred_fallthru
      _
    %p61 = scmp.gt.s32.totalorder %s46, 1
    // Predicated region
    $region14: #{inn_loss.1} parent=1 // pred_check
      %p62 = pneg %p61
    $region15: #{inn_loss.1} parent=1 // pred_check_branch
      %64 = sbr.rel (%p62) target = $region17
    $region16: #{inn_loss.1} parent=1 // pred_region
      %v65 = vld [vmem:[%s32] sm:$0xf]
      %v66 = vlaneseq
      %v67 = vshrl.u32 %v66, 7
      %v68 = vstv %s45
      %v69 = vadd.s32 %v68, %v67
      %vm70 = vcmp.lt.s32.totalorder %v69, 1
      %v71 = vmul.f32 %v65, %v65
      %v72 = vsel %vm70, 1, 0
      %vm73 = vcmp.eq.s32.totalorder %v72, 1
      %v75 = vlaneseq
      %v76 = vshrl.u32 %v75, 7
      %v77 = vsub.s32 0, %v76
      %v78 = vrot.slane %v71, %v77
      %v79 = vlaneseq
      %v80 = vshrl.u32 %v79, 7
      %v81 = vsub.s32 1, %v80
      %v82 = vrot.slane %v71, %v81
      %v83 = vlaneseq
      %v84 = vshrl.u32 %v83, 7
      %v85 = vsub.s32 2, %v84
      %v86 = vrot.slane %v71, %v85
      %v87 = vlaneseq
      %v88 = vshrl.u32 %v87, 7
      %v89 = vsub.s32 3, %v88
      %v90 = vrot.slane %v71, %v89
      %v95 = vsel %vm73, %v78, 0.0
      %v96 = vsel %vm73, %v82, 0.0
      %v97 = vsel %vm73, %v86, 0.0
      %v98 = vsel %vm73, %v90, 0.0
      %v99 = vld [vmem:[#allocation2] sm:$0xf]
      %v100 = vadd.f32 %v95, 0.0
      %v101 = vadd.f32 %v96, 0.0
      %v102 = vadd.f32 %v97, 0.0
      %v103 = vadd.f32 %v98, 0.0
      %v108 = vcombine.low %v100, %v101
      %v109 = vcombine.low %v102, %v103
      %v111 = vunpack.c.l.s4 1966171168
      %v112 = vunpack.c.0.s8 %v111
      %v113 = vlaneseq
      %v114 = vshrl.u32 %v113, 7
      %v115 = vsub.s32 %v112, %v114
      %v116 = vrot.slane %v108, %v115
      %v118 = vunpack.c.l.s4 1966171168
      %v119 = vunpack.c.0.s8 %v118
      %v120 = vlaneseq
      %v121 = vshrl.u32 %v120, 7
      %v122 = vsub.s32 %v119, %v121
      %v123 = vrot.slane %v109, %v122
      %v124 = vcombine.low %v116, %v123
      %v126 = vunpack.c.l.s4 1966171168
      %v127 = vunpack.c.0.s8 %v126
      %v128 = vlaneseq
      %v129 = vshrl.u32 %v128, 7
      %v130 = vsub.s32 %v127, %v129
      %v131 = vrot.slane %v124, %v130
      %v133 = vadd.f32 %v99, %v131
      %v134 = vlaneseq
      %vm135 = vcmp.ge.s32.totalorder %v134, 0
      %vm136 = vcmp.lt.s32.totalorder %v134, 512
      %vm137 = vmand %vm135, %vm136
      %138 = vst.msk [vmem:[#allocation2] sm:$0xf] %vm137, %v133
    $region17: #{inn_loss.1} parent=1 // pred_fallthru
      _
    // Predicated region
    $region18: #{inn_loss.1} parent=1 // pred_check
      %p139 = pneg %p36
    $region19: #{inn_loss.1} parent=1 // pred_check_branch
      %141 = sbr.rel (%p139) target = $region21
    $region20: #{inn_loss.1} parent=1 // pred_region
      %v142 = vld [vmem:[#allocation2] sm:$0xf]
      %v144 = vlaneseq
      %v145 = vshrl.u32 %v144, 7
      %v146 = vsub.s32 0, %v145
      %v147 = vrot.slane %v142, %v146
      %v148 = vlaneseq
      %v149 = vshrl.u32 %v148, 7
      %v150 = vsub.s32 1, %v149
      %v151 = vrot.slane %v142, %v150
      %v152 = vlaneseq
      %v153 = vshrl.u32 %v152, 7
      %v154 = vsub.s32 2, %v153
      %v155 = vrot.slane %v142, %v154
      %v156 = vlaneseq
      %v157 = vshrl.u32 %v156, 7
      %v158 = vsub.s32 3, %v157
      %v159 = vrot.slane %v142, %v158
      %vm164 = vcmask 1040384
      %v165 = vsel %vm164, %v147, 0.0
      %v166 = vsel %vm164, %v151, 0.0
      %v167 = vadd.f32 %v165, %v166
      %v168 = vsel %vm164, %v155, 0.0
      %v169 = vadd.f32 %v167, %v168
      %v170 = vsel %vm164, %v159, 0.0
      %v171 = vadd.f32 %v169, %v170
      %172 = vadd.xlane.f32.xlu0 %v171
      %v173 = vpop.xlane.xlu0 %172
      %v174 = vrot.slane %v173, 4
      %v175 = vadd.f32 %v173, %v174
      %v176 = vrot.slane %v175, 2
      %v177 = vadd.f32 %v175, %v176
      %v178 = vrot.slane %v177, 1
      %v179 = vadd.f32 %v177, %v178
      %s180 = vtos %v179
      %v181 = vstv %s180
      %vm182 = vcmask 0
      %183 = vst.msk [vmem:[#allocation3] sm:$0x1] %vm182, %v181
    $region21: #{inn_loss.1} parent=1 // pred_fallthru
      _
    // Predicated region
    $region22: #{inn_loss.1} parent=1 // pred_check
      _
    $region23: #{inn_loss.1} parent=1 // pred_check_branch
      %185 = sbr.rel (0) target = $region25
    $region24: #{inn_loss.1} parent=1 // pred_region
      %s187 = ssub.s32 16, 16
      %188 = vsyncadd [#allocation4], %s187
      %s190 = sshll.u32 [#allocation3], 4
      %s191 = int_to_ptr.vmem [resolvable:$true] %s190
      %193 = dma.vmem_to_hbm [thread:$0]  %s191, 16, %s1, [#allocation4]
    $region25: #{inn_loss.1} parent=1 // pred_fallthru
      _
    // Predicated region
    $region26: #{inn_loss.1} parent=1 // pred_check
      _
    $region27: #{inn_loss.1} parent=1 // pred_check_branch
      %195 = sbr.rel (0) target = $region29
    $region28: #{inn_loss.1} parent=1 // pred_region
      %196 = dma.done [#allocation4], 16
    $region29: #{inn_loss.1} parent=1 // pred_fallthru
      _
    %197 = vsyncpa [#allocation4], 1

</llo_original>
